<compile_context>
chip_gen: v5e
topology: v5e:2x2
jax: 0.10.0
libtpu: 0.0.40
codegen_flags: <defaults>
</compile_context>

<pallas_src>
import jax
import jax.numpy as jnp
from jax import lax
from jax.experimental import pallas as pl
from jax.experimental.pallas import tpu as pltpu

_LANE = 128   # lane width; row tiles kept multiples of this so out blocks stay lane-dense
_SUB = 8      # f32 sublane packing; weight slab height

# Contract the minor (feature) dim of both operands: (8, D) x (tb, D) -> (8, tb).
# Same "NT" dimension numbers as q @ k^T in the TPU flash-attention kernels.
_NT_DIMS = (((1,), (1,)), ((), ()))


def _logreg_kernel(x_ref, w_ref, b_ref, o_ref):
    # x_ref: (tb, D) native dtype VMEM; w_ref: (8, D) native dtype VMEM
    # (row 0 = weights, rows 1..7 zero); b_ref: (1,) f32 SMEM; o_ref: (1, tb) f32.
    logits = lax.dot_general(
        w_ref[...], x_ref[...], _NT_DIMS,
        preferred_element_type=jnp.float32)          # (8, tb): MXU, f32 accumulate
    row = logits[0:1, :] + b_ref[0]                  # (1, tb) lane-dense logits
    o_ref[...] = jax.nn.sigmoid(row).astype(o_ref.dtype)


def _round_up(v, m):
    return (v + m - 1) // m * m


def _pick_tile_b(batch, d, itemsize):
    """Rows of x per grid step: ~6 MiB of x per tile (double-buffered), a multiple
    of 128 (lane-dense output block), never much larger than the batch, and split
    so large batches always produce >= 2 tiles (v7x megacore)."""
    row_bytes = max(1, d * itemsize)
    target_bytes = 6 * 1024 * 1024
    tb = max(_LANE, target_bytes // row_bytes // _LANE * _LANE)
    tb = min(tb, 64 * 1024)                      # bound (8, tb) f32 logits / out buffers
    tb = min(tb, _round_up(batch, _LANE))        # don't allocate far past the batch
    if tb >= batch and batch > 2 * _LANE:        # ensure >= 2 tiles for both v7x TCs
        tb = _round_up((batch + 1) // 2, _LANE)
    return tb


def logistic_regression_forward(x, weight, bias=None):
    """x: (B, D); weight: (1, D) [PyTorch nn.Linear layout] or (D,); bias: () or None.

    Returns sigmoid(x @ weight.T + bias) with shape (B,) float32, matching
    torch.sigmoid(self.linear(x)).squeeze(1).
    """
    B, D = x.shape
    itemsize = jnp.dtype(x.dtype).itemsize

    # Weight as an (8, D) native-dtype slab (row 0 real, rest zero): full sublanes for
    # the MXU LHS; staying in x's dtype keeps HBM/VMEM traffic narrow (f32 acc in MXU).
    w_slab = jnp.zeros((_SUB, D), x.dtype).at[0].set(
        jnp.asarray(weight).reshape(D).astype(x.dtype))
    if bias is None:
        bias = jnp.zeros((), jnp.float32)
    b_smem = jnp.asarray(bias, jnp.float32).reshape(1)

    tb = _pick_tile_b(B, D, itemsize)
    n_tiles = pl.cdiv(B, tb)
    b_pad = n_tiles * tb        # output-only padding; x itself is never padded/copied

    # Actual VMEM footprint: x double buffer + lane-dense out double buffer + w + logits.
    footprint = (2 * tb * D * itemsize + 2 * _SUB * tb * 4
                 + 2 * _SUB * D * itemsize + _SUB * tb * 4 + (4 << 20))
    vmem_limit = int(min(112 * 2**20, max(32 * 2**20, footprint)))

    out = pl.pallas_call(
        _logreg_kernel,
        out_shape=jax.ShapeDtypeStruct((1, b_pad), jnp.float32),
        grid_spec=pltpu.PrefetchScalarGridSpec(
            num_scalar_prefetch=0,
            grid=(n_tiles,),
            in_specs=[
                pl.BlockSpec((tb, D), lambda i: (i, 0)),            # x row tile (clipped)
                pl.BlockSpec((_SUB, D), lambda i: (0, 0)),          # weight slab (resident)
                pl.BlockSpec(memory_space=pltpu.MemorySpace.SMEM),  # bias scalar
            ],
            out_specs=pl.BlockSpec((1, tb), lambda i: (0, i)),      # lane-dense row
        ),
        compiler_params=pltpu.CompilerParams(
            dimension_semantics=("parallel",),   # shard row tiles across v7x's 2 TCs
            vmem_limit_bytes=vmem_limit,
        ),
    )(x, w_slab, b_smem)

    # TODO(synk): tile the feature dim with an accumulator grid axis if input_dim ever
    # gets large enough that a single (tb, D) x tile cannot fit in VMEM.
    return out[0, :B]   # squeeze(1); lanes past B hold boundary-tile garbage, dropped here


if __name__ == "__main__":
    key = jax.random.PRNGKey(0)
    k_x, k_w, k_b = jax.random.split(key, 3)

    B, D = 8, 32  # small demo: batch=8, input_dim=32
    x = jax.random.normal(k_x, (B, D), dtype=jnp.float32)

    # Deterministic parameter init mimicking nn.Linear(input_dim, 1, bias=True)
    bound = 1.0 / jnp.sqrt(D)
    weight = jax.random.uniform(k_w, (1, D), minval=-bound, maxval=bound,
                                dtype=jnp.float32)
    bias = jax.random.uniform(k_b, (), minval=-bound, maxval=bound,
                              dtype=jnp.float32)

    # f32 path
    out = logistic_regression_forward(x, weight, bias)
    out = jax.block_until_ready(out)
    ref = jax.nn.sigmoid(x @ weight.T + bias)[:, 0]
    assert out.shape == (B,)
    assert jnp.allclose(out, ref, atol=2e-3, rtol=2e-3)

    # bf16 native-dtype path (HBM traffic stays bf16; MXU accumulates in f32)
    x_bf = x.astype(jnp.bfloat16)
    w_bf = weight.astype(jnp.bfloat16)
    out_bf = logistic_regression_forward(x_bf, w_bf, bias)
    out_bf = jax.block_until_ready(out_bf)
    ref_bf = jax.nn.sigmoid(
        x_bf.astype(jnp.float32) @ w_bf.astype(jnp.float32).T + bias)[:, 0]
    assert out_bf.shape == (B,)
    assert jnp.allclose(out_bf, ref_bf, atol=2e-2, rtol=2e-2)

    # use_bias=False path
    out_nb = jax.block_until_ready(logistic_regression_forward(x, weight, None))
    ref_nb = jax.nn.sigmoid(x @ weight.T)[:, 0]
    assert jnp.allclose(out_nb, ref_nb, atol=2e-3, rtol=2e-3)

    print("KERNEL_OK")
</pallas_src>

<mosaic_0001>
module attributes {stable_mosaic.version = 11 : i64} {
  func.func @_logreg_kernel(%arg0: i32, %arg1: memref<128x32xf32, #tpu.memory_space<vmem>>, %arg2: memref<8x32xf32, #tpu.memory_space<vmem>>, %arg3: memref<1xf32, #tpu.memory_space<smem>>, %arg4: memref<1x128xf32, #tpu.memory_space<vmem>>) attributes {dimension_semantics = [#tpu.dimension_semantics<parallel>], iteration_bounds = array<i64: 1>, scalar_prefetch = 0 : i64, scratch_operands = 0 : i64, tpu.core_type = #tpu.core_type<tc>, window_params = [{transform_indices = @transform_0, window_bounds = array<i64: 128, 32>}, {pipeline_mode = #tpu.pipeline_mode<synchronous>, transform_indices = @transform_1, window_bounds = array<i64: 8, 32>}, {transform_indices = @transform_2, window_bounds = array<i64: 1>}, {transform_indices = @transform_3, window_bounds = array<i64: 1, 128>}]} {
    %c0 = arith.constant 0 : index
    %c0_0 = arith.constant 0 : index
    %0 = vector.load %arg2[%c0, %c0_0] : memref<8x32xf32, #tpu.memory_space<vmem>>, vector<8x32xf32>
    %c0_1 = arith.constant 0 : index
    %c0_2 = arith.constant 0 : index
    %1 = vector.load %arg1[%c0_1, %c0_2] : memref<128x32xf32, #tpu.memory_space<vmem>>, vector<128x32xf32>
    %cst = arith.constant dense<0.000000e+00> : vector<8x128xf32>
    %2 = tpu.matmul %0, %1, %cst {dimension_numbers = #tpu.dot_dimension_numbers<[1], [1], [0], [0], [0, 0, 1, 0], [], []>} : vector<8x32xf32>, vector<128x32xf32>, vector<8x128xf32> -> vector<8x128xf32>
    %3 = vector.extract_strided_slice %2 {offsets = [0, 0], sizes = [1, 128], strides = [1, 1]} : vector<8x128xf32> to vector<1x128xf32>
    %c0_3 = arith.constant 0 : index
    %4 = memref.load %arg3[%c0_3] : memref<1xf32, #tpu.memory_space<smem>>
    %5 = vector.broadcast %4 : f32 to vector<1x128xf32>
    %6 = arith.addf %3, %5 : vector<1x128xf32>
    %7 = arith.negf %6 : vector<1x128xf32>
    %8 = math.exp %7 : vector<1x128xf32>
    %cst_4 = arith.constant 1.000000e+00 : f32
    %9 = vector.broadcast %cst_4 : f32 to vector<1x128xf32>
    %10 = arith.addf %9, %8 : vector<1x128xf32>
    %11 = arith.divf %9, %10 : vector<1x128xf32>
    %c0_5 = arith.constant 0 : index
    %c0_6 = arith.constant 0 : index
    %12 = vector.load %arg4[%c0_5, %c0_6] : memref<1x128xf32, #tpu.memory_space<vmem>>, vector<1x128xf32>
    tpu.vector_store %arg4[%c0_5, %c0_6], %11 {strides = array<i32>} : memref<1x128xf32, #tpu.memory_space<vmem>>, vector<1x128xf32>,
    return
  }
  func.func @transform_0(%arg0: i32) -> (i32, i32) {
    %c0_i32 = arith.constant 0 : i32
    %c0_i32_0 = arith.constant 0 : i32
    return %arg0, %c0_i32 : i32, i32
  }
  func.func @transform_1(%arg0: i32) -> (i32, i32) {
    %c0_i32 = arith.constant 0 : i32
    %c0_i32_0 = arith.constant 0 : i32
    %c0_i32_1 = arith.constant 0 : i32
    return %c0_i32, %c0_i32_0 : i32, i32
  }
  func.func @transform_2(%arg0: i32) -> i32 {
    %c0_i32 = arith.constant 0 : i32
    %c0_i32_0 = arith.constant 0 : i32
    return %c0_i32 : i32
  }
  func.func @transform_3(%arg0: i32) -> (i32, i32) {
    %c0_i32 = arith.constant 0 : i32
    %c0_i32_0 = arith.constant 0 : i32
    return %c0_i32, %arg0 : i32, i32
  }
}

</mosaic_0001>

<llo_original>
// kernel: tpu_custom_call.1
$region0: #{tpu_custom_call.1}
  #allocation0 [shape = 'u32[]', space=smem, size = 0x4, offset = 0x4, fixed_abs, tag = 'smem constant byte address 0x4 - core index']
  #allocation1 [shape = 'u32[72,128]{1,0:T(1,128)}', space=vmem, size = 0x9000, scoped, tag = 'internal scratch']
  #allocation2 [shape = 'f32[1]{0:T(128)S(6)}', space=smem, size = 0x200, scoped, tag = 'scoped memory for tpu_custom_call.1']
  %s0 = inlined_call_operand.hbm [shape: f32[8,32], index: 0, kind: input, shape index: {}]
  %s1 = inlined_call_operand.hbm [shape: f32[8,32], index: 1, kind: input, shape index: {}]
  %s2 = inlined_call_operand.<no memory space> [shape: f32[1], index: 2, kind: input, shape index: {}]
  %s3 = inlined_call_operand.hbm [shape: f32[1,128], index: 3, kind: output, shape index: {}]
  %s4 = sld [smem:[#allocation0]]
  $region30: #{tpu_custom_call.1} parent=0
    _
  %s6 = ssub.s32 1, %s4
  %s7 = scalar_select 0, %s6, %s4
  %8 = sst [smem:[#allocation2]] %s2
  $region1: #{tpu_custom_call.1} parent=0
    #allocation3 [shape = 'u8[65536]{0}', space=vmem, size = 0x10000, scoped, tag = 'input window, operand 0, single buffered']
    #allocation4 [shape = 's32[1]{0}', space=sflag, size = 0x4, scoped, tag = 'scoped memory for tpu_custom_call.1']
    #allocation5 [shape = 's32[1]{0}', space=sflag, size = 0x4, scoped, tag = 'scoped memory for tpu_custom_call.1']
    #allocation6 [shape = 'u8[4096]{0}', space=vmem, size = 0x1000, scoped, tag = 'input window, operand 1, single buffered']
    #allocation7 [shape = 's32[1]{0}', space=sflag, size = 0x4, scoped, tag = 'scoped memory for tpu_custom_call.1']
    #allocation8 [shape = 'u8[512]{0}', space=vmem, size = 0x400, scoped, tag = 'output window, operand 0, single buffered']
    %9 = vsyncpa [#allocation4], 0
    %10 = vsyncpa [#allocation7], 0
    %11 = vsyncpa [#allocation5], 0
    // Predicated region
    $region2: #{tpu_custom_call.1} parent=1 // pred_check
      _
    $region3: #{tpu_custom_call.1} parent=1 // pred_check_branch
      %13 = sbr.rel (0) target = $region5
    $region4: #{tpu_custom_call.1} parent=1 // pred_region
      %15 = vsyncadd [#allocation4], 1920
      %s16 = sshll.u32 %s0, 4
      %s17 = int_to_ptr.hbm [resolvable:$true] %s16
      %s18 = sshll.u32 [#allocation3], 4
      %s19 = int_to_ptr.vmem [resolvable:$true] %s18
      %24 = dma.hbm_to_vmem [thread:$0]  %s17, 128, %s19, [#allocation4], 128, 128, 8
    $region5: #{tpu_custom_call.1} parent=1 // pred_fallthru
      _
    // Predicated region
    $region6: #{tpu_custom_call.1} parent=1 // pred_check
      _
    $region7: #{tpu_custom_call.1} parent=1 // pred_check_branch
      %26 = sbr.rel (0) target = $region9
    $region8: #{tpu_custom_call.1} parent=1 // pred_region
      %28 = vsyncadd [#allocation7], 0
      %s30 = sshll.u32 %s1, 4
      %s31 = int_to_ptr.hbm [resolvable:$true] %s30
      %s32 = sshll.u32 [#allocation6], 4
      %s33 = int_to_ptr.vmem [resolvable:$true] %s32
      %35 = dma.hbm_to_vmem [thread:$0]  %s31, 128, %s33, [#allocation7]
    $region9: #{tpu_custom_call.1} parent=1 // pred_fallthru
      _
    // Predicated region
    $region10: #{tpu_custom_call.1} parent=1 // pred_check
      _
    $region11: #{tpu_custom_call.1} parent=1 // pred_check_branch
      %37 = sbr.rel (0) target = $region13
    $region12: #{tpu_custom_call.1} parent=1 // pred_region
      _
    $region13: #{tpu_custom_call.1} parent=1 // pred_fallthru
      _
    // Predicated region
    $region14: #{tpu_custom_call.1} parent=1 // pred_check
      _
    $region15: #{tpu_custom_call.1} parent=1 // pred_check_branch
      %39 = sbr.rel (0) target = $region17
    $region16: #{tpu_custom_call.1} parent=1 // pred_region
      %41 = dma.done [#allocation4], 2048
    $region17: #{tpu_custom_call.1} parent=1 // pred_fallthru
      _
    // Predicated region
    $region18: #{tpu_custom_call.1} parent=1 // pred_check
      _
    $region19: #{tpu_custom_call.1} parent=1 // pred_check_branch
      %43 = sbr.rel (0) target = $region21
    $region20: #{tpu_custom_call.1} parent=1 // pred_region
      %45 = dma.done [#allocation7], 128
    $region21: #{tpu_custom_call.1} parent=1 // pred_fallthru
      _
    %v46 = vld [vmem:[#allocation6] sm:$0xff]
    %v47 = vld [vmem:[#allocation3] sm:$0xff]
    %v48 = vld [vmem:[#allocation3 + $0x8] sm:$0xff]
    %v49 = vld [vmem:[#allocation3 + $0x10] sm:$0xff]
    %v50 = vld [vmem:[#allocation3 + $0x18] sm:$0xff]
    %v51 = vld [vmem:[#allocation3 + $0x20] sm:$0xff]
    %v52 = vld [vmem:[#allocation3 + $0x28] sm:$0xff]
    %v53 = vld [vmem:[#allocation3 + $0x30] sm:$0xff]
    %v54 = vld [vmem:[#allocation3 + $0x38] sm:$0xff]
    %v55 = vld [vmem:[#allocation3 + $0x40] sm:$0xff]
    %v56 = vld [vmem:[#allocation3 + $0x48] sm:$0xff]
    %v57 = vld [vmem:[#allocation3 + $0x50] sm:$0xff]
    %v58 = vld [vmem:[#allocation3 + $0x58] sm:$0xff]
    %v59 = vld [vmem:[#allocation3 + $0x60] sm:$0xff]
    %v60 = vld [vmem:[#allocation3 + $0x68] sm:$0xff]
    %v61 = vld [vmem:[#allocation3 + $0x70] sm:$0xff]
    %v62 = vld [vmem:[#allocation3 + $0x78] sm:$0xff]
    %vm63 = vcmask 261120
    %v65 = vsel %vm63, %v46, 0
    %v68 = vsel %vm63, %v47, 0
    %v71 = vsel %vm63, %v48, 0
    %v74 = vsel %vm63, %v49, 0
    %v77 = vsel %vm63, %v50, 0
    %v80 = vsel %vm63, %v51, 0
    %v83 = vsel %vm63, %v52, 0
    %v86 = vsel %vm63, %v53, 0
    %v89 = vsel %vm63, %v54, 0
    %v92 = vsel %vm63, %v55, 0
    %v95 = vsel %vm63, %v56, 0
    %v98 = vsel %vm63, %v57, 0
    %v101 = vsel %vm63, %v58, 0
    %v104 = vsel %vm63, %v59, 0
    %v107 = vsel %vm63, %v60, 0
    %v110 = vsel %vm63, %v61, 0
    %v113 = vsel %vm63, %v62, 0
    %115 = vmatpush.xpose.msra.mxu0 %v113
    %116 = vmatpush.xpose.msra.mxu0 %v110
    %117 = vmatpush.xpose.msra.mxu0 %v107
    %118 = vmatpush.xpose.msra.mxu0 %v104
    %119 = vmatpush.xpose.msra.mxu0 %v101
    %120 = vmatpush.xpose.msra.mxu0 %v98
    %121 = vmatpush.xpose.msra.mxu0 %v95
    %122 = vmatpush.xpose.msra.mxu0 %v92
    %123 = vmatpush.xpose.msra.mxu0 %v89
    %124 = vmatpush.xpose.msra.mxu0 %v86
    %125 = vmatpush.xpose.msra.mxu0 %v83
    %126 = vmatpush.xpose.msra.mxu0 %v80
    %127 = vmatpush.xpose.msra.mxu0 %v77
    %128 = vmatpush.xpose.msra.mxu0 %v74
    %129 = vmatpush.xpose.msra.mxu0 %v71
    %130 = vmatpush.xpose.msra.mxu0 %v68
    %131 = vmatmul.f32.gmra.mxu0 %v65
    %v132 = vpop.f32.mrf.mxu0
    %v133 = vadd.f32 0.0, %v132
    %134 = vdwg.mxu0
    %s135 = sld [smem:[#allocation2]]
    %v136 = vstv %s135
    %v137 = vadd.f32 %v133, %v136
    %v138 = vxor.u32 %v137, 2147483648
    %v139 = vmul.f32 %v138, 1.442695
    %v140 = vpow.pop %v139
    %v141 = vadd.f32 %v140, 1.0
    %v142 = vrcp.pop %v141
    %v143 = vmul.f32 %v141, %v142
    %v144 = vsub.f32 1.0, %v143
    %v145 = vmul.f32 %v142, %v144
    %v146 = vadd.f32 %v142, %v145
    %vm147 = vweird.f32 %v141
    %vm148 = vweird.f32 %v142
    %vm149 = vmor %vm147, %vm148
    %v150 = vsel %vm149, %v142, %v146
    %v151 = vand.u32 2147483647, %v141
    %vm152 = vcmp.eq.f32.partialorder %v151, 8.507059e+37
    %v153 = vand.u32 %v141, 2147483648
    %v154 = vor.u32 1.1754944e-38, %v153
    %v155 = vsel %vm152, %v154, %v150
    %v156 = vmul.f32 1.0, %v155
    %157 = vst [vmem:[#allocation8] sm:$0x1] %v156
    // Predicated region
    $region22: #{tpu_custom_call.1} parent=1 // pred_check
      _
    $region23: #{tpu_custom_call.1} parent=1 // pred_check_branch
      %159 = sbr.rel (0) target = $region25
    $region24: #{tpu_custom_call.1} parent=1 // pred_region
      %161 = vsyncadd [#allocation5], 0
      %s163 = sshll.u32 [#allocation8], 4
      %s164 = int_to_ptr.vmem [resolvable:$true] %s163
      %s165 = sshll.u32 %s3, 4
      %s166 = int_to_ptr.hbm [resolvable:$true] %s165
      %168 = dma.vmem_to_hbm [thread:$0]  %s164, 16, %s166, [#allocation5]
    $region25: #{tpu_custom_call.1} parent=1 // pred_fallthru
      _
    // Predicated region
    $region26: #{tpu_custom_call.1} parent=1 // pred_check
      _
    $region27: #{tpu_custom_call.1} parent=1 // pred_check_branch
      %170 = sbr.rel (0) target = $region29
    $region28: #{tpu_custom_call.1} parent=1 // pred_region
      %172 = dma.done [#allocation5], 16
    $region29: #{tpu_custom_call.1} parent=1 // pred_fallthru
      _
    %173 = vsyncpa [#allocation4], 1
    %174 = vsyncpa [#allocation7], 1
    %175 = vsyncpa [#allocation5], 1

</llo_original>
